<compile_context>
chip_gen: v7x
topology: tpu7x:2x2x1
jax: 0.10.0
libtpu: 0.0.40
codegen_flags: <defaults>
</compile_context>

<pallas_src>
import jax
import jax.numpy as jnp
import numpy as np
from jax.experimental import pallas as pl
from jax.experimental.pallas import tpu as pltpu


def _round_up(n, m):
    return ((n + m - 1) // m) * m


def _fc_weighted_agg_kernel(x_ref, w1_ref, b1_ref, w2_ref, b2_ref,
                            ws_ref, bs_ref, we_ref, wfold_ref, o_ref):
    x = x_ref[...]                                           # (TB, C*H), lane-dense

    # fc_filter_1 + ReLU  (dense (TB,CH)@(CH,CH) MXU tile)
    x1 = jnp.maximum(
        jnp.dot(x, w1_ref[...], preferred_element_type=jnp.float32) + b1_ref[...],
        0.0)

    # channel mix (fc_channel_1) + ReLU  (dense (TB,CH)@(CH,CH) MXU tile)
    x2 = jnp.maximum(
        jnp.dot(x1, w2_ref[...], preferred_element_type=jnp.float32) + b2_ref[...],
        0.0)

    # per-channel attention scores: (TB, C)
    s = jnp.dot(x2, ws_ref[...], preferred_element_type=jnp.float32) + bs_ref[...]

    # softmax over the channel axis (last axis here, C values per row)
    m = jnp.max(s, axis=-1, keepdims=True)
    e = jnp.exp(s - m)
    w_att = e * pl.reciprocal(jnp.sum(e, axis=-1, keepdims=True), approx=True)

    # expand weights back onto the C*H lanes and aggregate channels -> (TB, H)
    w_exp = jnp.dot(w_att, we_ref[...], preferred_element_type=jnp.float32)
    ctx = jnp.dot(w_exp * x2, wfold_ref[...], preferred_element_type=jnp.float32)

    o_ref[...] = ctx.astype(o_ref.dtype)


def fc_weighted_aggregation(x, wf, bf, wc, bc, wfc, bfc, *, block_b=512):
    """x: (B, C, H) float32. Returns context: (B, H) float32."""
    B, C, H = x.shape
    CH = C * H
    f32 = jnp.float32

    # ---- one-time wrapper-side weight preprocessing (flattened C*H layout) ----
    eye_c = jnp.eye(C, dtype=f32)
    w1 = jnp.kron(eye_c, wf.astype(f32).T)                     # (CH, CH)  block-diag of Wf^T
    b1 = jnp.tile(bf.astype(f32), C).reshape(1, CH)            # (1, CH)   b1[c*H+f] = bf[f]
    w2 = jnp.kron(wc.astype(f32).T, jnp.eye(H, dtype=f32))     # (CH, CH)  kron(Wc^T, I_H)
    b2 = jnp.repeat(bc.astype(f32), H).reshape(1, CH)          # (1, CH)   b2[j*H+f] = bc[j]
    ws = jnp.kron(eye_c, wfc.astype(f32).reshape(H, 1))        # (CH, C)   score projection
    bs = bfc.astype(f32).reshape(1, 1)                         # (1, 1)
    we = jnp.kron(eye_c, jnp.ones((1, H), f32))                # (C, CH)   weight expansion
    wfold = jnp.tile(jnp.eye(H, dtype=f32), (C, 1))            # (CH, H)   channel fold

    x_flat = x.astype(f32).reshape(B, CH)

    # ---- batch tiling: TB rows per grid step (multiple of 8) ----
    tb = min(block_b, _round_up(B, 8))
    bp = _round_up(B, tb)
    if bp != B:
        x_flat = jnp.pad(x_flat, ((0, bp - B), (0, 0)))
    grid = (bp // tb,)

    grid_spec = pltpu.PrefetchScalarGridSpec(
        num_scalar_prefetch=0,
        grid=grid,
        in_specs=[
            pl.BlockSpec((tb, CH), lambda i: (i, 0)),   # x slab (per batch tile)
            pl.BlockSpec((CH, CH), lambda i: (0, 0)),   # W1
            pl.BlockSpec((1, CH), lambda i: (0, 0)),    # b1
            pl.BlockSpec((CH, CH), lambda i: (0, 0)),   # W2
            pl.BlockSpec((1, CH), lambda i: (0, 0)),    # b2
            pl.BlockSpec((CH, C), lambda i: (0, 0)),    # score matrix
            pl.BlockSpec((1, 1), lambda i: (0, 0)),     # score bias
            pl.BlockSpec((C, CH), lambda i: (0, 0)),    # weight expansion
            pl.BlockSpec((CH, H), lambda i: (0, 0)),    # channel fold
        ],
        out_specs=pl.BlockSpec((tb, H), lambda i: (i, 0)),
    )

    out = pl.pallas_call(
        _fc_weighted_agg_kernel,
        out_shape=jax.ShapeDtypeStruct((bp, H), f32),
        grid_spec=grid_spec,
        compiler_params=pltpu.CompilerParams(
            dimension_semantics=("parallel",)),
    )(x_flat, w1, b1, w2, b2, ws, bs, we, wfold)

    return out[:B]


def _reference(x, wf, bf, wc, bc, wfc, bfc):
    """Plain-JAX reference mirroring the PyTorch forward exactly."""
    x1 = jax.nn.relu(jnp.einsum("bch,fh->bcf", x, wf) + bf)          # Linear + ReLU
    xp = jnp.transpose(x1, (0, 2, 1))                                # (B, H, C)
    x2p = jax.nn.relu(jnp.einsum("bhc,jc->bhj", xp, wc) + bc)        # Linear + ReLU
    x2 = jnp.transpose(x2p, (0, 2, 1))                               # (B, C, H)
    out = jnp.einsum("bch,oh->bco", x2, wfc)[..., 0] + bfc[0]        # (B, C)
    w = jax.nn.softmax(out, axis=1)[..., None]                       # (B, C, 1)
    return jnp.sum(w * x2, axis=1)                                   # (B, H)


if __name__ == "__main__":
    B, C, H = 2, 4, 32   # batch, sensor_channel, hidden_dim
    key = jax.random.PRNGKey(0)
    kx, k1, k2, k3, k4, k5, k6 = jax.random.split(key, 7)

    x = jax.random.normal(kx, (B, C, H), dtype=jnp.float32)

    # Deterministic parameter init (synthetic; PyTorch-Linear-style shapes).
    wf = jax.random.normal(k1, (H, H), dtype=jnp.float32) * 0.1   # fc_filter_1.weight
    bf = jax.random.normal(k2, (H,), dtype=jnp.float32) * 0.1     # fc_filter_1.bias
    wc = jax.random.normal(k3, (C, C), dtype=jnp.float32) * 0.1   # fc_channel_1.weight
    bc = jax.random.normal(k4, (C,), dtype=jnp.float32) * 0.1     # fc_channel_1.bias
    wfc = jax.random.normal(k5, (1, H), dtype=jnp.float32) * 0.1  # fc.weight
    bfc = jax.random.normal(k6, (1,), dtype=jnp.float32) * 0.1    # fc.bias

    out = fc_weighted_aggregation(x, wf, bf, wc, bc, wfc, bfc)
    out = jax.block_until_ready(out)

    ref = _reference(x, wf, bf, wc, bc, wfc, bfc)
    # Slightly relaxed tolerance: softmax denominator uses EUP approx reciprocal.
    np.testing.assert_allclose(np.asarray(out), np.asarray(ref),
                               rtol=2e-3, atol=2e-3)
    print("KERNEL_OK")
</pallas_src>

<mosaic_0001>
module attributes {stable_mosaic.version = 11 : i64} {
  func.func @_fc_weighted_agg_kernel(%arg0: i32, %arg1: memref<8x128xf32, #tpu.memory_space<vmem>>, %arg2: memref<128x128xf32, #tpu.memory_space<vmem>>, %arg3: memref<1x128xf32, #tpu.memory_space<vmem>>, %arg4: memref<128x128xf32, #tpu.memory_space<vmem>>, %arg5: memref<1x128xf32, #tpu.memory_space<vmem>>, %arg6: memref<128x4xf32, #tpu.memory_space<vmem>>, %arg7: memref<1x1xf32, #tpu.memory_space<vmem>>, %arg8: memref<4x128xf32, #tpu.memory_space<vmem>>, %arg9: memref<128x32xf32, #tpu.memory_space<vmem>>, %arg10: memref<8x32xf32, #tpu.memory_space<vmem>>) attributes {dimension_semantics = [#tpu.dimension_semantics<parallel>], iteration_bounds = array<i64: 1>, scalar_prefetch = 0 : i64, scratch_operands = 0 : i64, tpu.core_type = #tpu.core_type<tc>, window_params = [{transform_indices = @transform_0, window_bounds = array<i64: 8, 128>}, {pipeline_mode = #tpu.pipeline_mode<synchronous>, transform_indices = @transform_1, window_bounds = array<i64: 128, 128>}, {pipeline_mode = #tpu.pipeline_mode<synchronous>, transform_indices = @transform_2, window_bounds = array<i64: 1, 128>}, {pipeline_mode = #tpu.pipeline_mode<synchronous>, transform_indices = @transform_3, window_bounds = array<i64: 128, 128>}, {pipeline_mode = #tpu.pipeline_mode<synchronous>, transform_indices = @transform_4, window_bounds = array<i64: 1, 128>}, {pipeline_mode = #tpu.pipeline_mode<synchronous>, transform_indices = @transform_5, window_bounds = array<i64: 128, 4>}, {pipeline_mode = #tpu.pipeline_mode<synchronous>, transform_indices = @transform_6, window_bounds = array<i64: 1, 1>}, {pipeline_mode = #tpu.pipeline_mode<synchronous>, transform_indices = @transform_7, window_bounds = array<i64: 4, 128>}, {pipeline_mode = #tpu.pipeline_mode<synchronous>, transform_indices = @transform_8, window_bounds = array<i64: 128, 32>}, {transform_indices = @transform_9, window_bounds = array<i64: 8, 32>}]} {
    %c0 = arith.constant 0 : index
    %c0_0 = arith.constant 0 : index
    %0 = vector.load %arg1[%c0, %c0_0] : memref<8x128xf32, #tpu.memory_space<vmem>>, vector<8x128xf32>
    %c0_1 = arith.constant 0 : index
    %c0_2 = arith.constant 0 : index
    %1 = vector.load %arg2[%c0_1, %c0_2] : memref<128x128xf32, #tpu.memory_space<vmem>>, vector<128x128xf32>
    %cst = arith.constant dense<0.000000e+00> : vector<8x128xf32>
    %2 = tpu.matmul %0, %1, %cst {dimension_numbers = #tpu.dot_dimension_numbers<[1], [0], [0], [1], [0, 0, 1, 1], [], []>} : vector<8x128xf32>, vector<128x128xf32>, vector<8x128xf32> -> vector<8x128xf32>
    %c0_3 = arith.constant 0 : index
    %c0_4 = arith.constant 0 : index
    %3 = vector.load %arg3[%c0_3, %c0_4] : memref<1x128xf32, #tpu.memory_space<vmem>>, vector<1x128xf32>
    %4 = vector.broadcast %3 : vector<1x128xf32> to vector<8x128xf32>
    %5 = arith.addf %2, %4 : vector<8x128xf32>
    %cst_5 = arith.constant 0.000000e+00 : f32
    %6 = vector.broadcast %cst_5 : f32 to vector<8x128xf32>
    %7 = arith.maximumf %5, %6 : vector<8x128xf32>
    %c0_6 = arith.constant 0 : index
    %c0_7 = arith.constant 0 : index
    %8 = vector.load %arg4[%c0_6, %c0_7] : memref<128x128xf32, #tpu.memory_space<vmem>>, vector<128x128xf32>
    %cst_8 = arith.constant dense<0.000000e+00> : vector<8x128xf32>
    %9 = tpu.matmul %7, %8, %cst_8 {dimension_numbers = #tpu.dot_dimension_numbers<[1], [0], [0], [1], [0, 0, 1, 1], [], []>} : vector<8x128xf32>, vector<128x128xf32>, vector<8x128xf32> -> vector<8x128xf32>
    %c0_9 = arith.constant 0 : index
    %c0_10 = arith.constant 0 : index
    %10 = vector.load %arg5[%c0_9, %c0_10] : memref<1x128xf32, #tpu.memory_space<vmem>>, vector<1x128xf32>
    %11 = vector.broadcast %10 : vector<1x128xf32> to vector<8x128xf32>
    %12 = arith.addf %9, %11 : vector<8x128xf32>
    %cst_11 = arith.constant 0.000000e+00 : f32
    %13 = vector.broadcast %cst_11 : f32 to vector<8x128xf32>
    %14 = arith.maximumf %12, %13 : vector<8x128xf32>
    %c0_12 = arith.constant 0 : index
    %c0_13 = arith.constant 0 : index
    %15 = vector.load %arg6[%c0_12, %c0_13] : memref<128x4xf32, #tpu.memory_space<vmem>>, vector<128x4xf32>
    %cst_14 = arith.constant dense<0.000000e+00> : vector<8x4xf32>
    %16 = tpu.matmul %14, %15, %cst_14 {dimension_numbers = #tpu.dot_dimension_numbers<[1], [0], [0], [1], [0, 0, 1, 1], [], []>} : vector<8x128xf32>, vector<128x4xf32>, vector<8x4xf32> -> vector<8x4xf32>
    %c0_15 = arith.constant 0 : index
    %c0_16 = arith.constant 0 : index
    %17 = vector.load %arg7[%c0_15, %c0_16] : memref<1x1xf32, #tpu.memory_space<vmem>>, vector<1x1xf32>
    %18 = vector.broadcast %17 : vector<1x1xf32> to vector<8x4xf32>
    %19 = arith.addf %16, %18 : vector<8x4xf32>
    %cst_17 = arith.constant dense<0xFF800000> : vector<8xf32>
    %20 = vector.multi_reduction <maximumf>, %19, %cst_17 [1] : vector<8x4xf32> to vector<8xf32>
    %21 = vector.shape_cast %20 : vector<8xf32> to vector<8x1xf32>
    %22 = vector.broadcast %21 : vector<8x1xf32> to vector<8x4xf32>
    %23 = arith.subf %19, %22 : vector<8x4xf32>
    %24 = math.exp %23 : vector<8x4xf32>
    %cst_18 = arith.constant dense<0.000000e+00> : vector<8xf32>
    %25 = vector.multi_reduction <add>, %24, %cst_18 [1] : vector<8x4xf32> to vector<8xf32>
    %26 = vector.shape_cast %25 : vector<8xf32> to vector<8x1xf32>
    %27 = tpu.reciprocal %26 {approx = true} : vector<8x1xf32> -> vector<8x1xf32>
    %28 = vector.broadcast %27 : vector<8x1xf32> to vector<8x4xf32>
    %29 = arith.mulf %24, %28 : vector<8x4xf32>
    %c0_19 = arith.constant 0 : index
    %c0_20 = arith.constant 0 : index
    %30 = vector.load %arg8[%c0_19, %c0_20] : memref<4x128xf32, #tpu.memory_space<vmem>>, vector<4x128xf32>
    %cst_21 = arith.constant dense<0.000000e+00> : vector<8x128xf32>
    %31 = tpu.matmul %29, %30, %cst_21 {dimension_numbers = #tpu.dot_dimension_numbers<[1], [0], [0], [1], [0, 0, 1, 1], [], []>} : vector<8x4xf32>, vector<4x128xf32>, vector<8x128xf32> -> vector<8x128xf32>
    %32 = arith.mulf %31, %14 : vector<8x128xf32>
    %c0_22 = arith.constant 0 : index
    %c0_23 = arith.constant 0 : index
    %33 = vector.load %arg9[%c0_22, %c0_23] : memref<128x32xf32, #tpu.memory_space<vmem>>, vector<128x32xf32>
    %cst_24 = arith.constant dense<0.000000e+00> : vector<8x32xf32>
    %34 = tpu.matmul %32, %33, %cst_24 {dimension_numbers = #tpu.dot_dimension_numbers<[1], [0], [0], [1], [0, 0, 1, 1], [], []>} : vector<8x128xf32>, vector<128x32xf32>, vector<8x32xf32> -> vector<8x32xf32>
    %c0_25 = arith.constant 0 : index
    %c0_26 = arith.constant 0 : index
    %35 = vector.load %arg10[%c0_25, %c0_26] : memref<8x32xf32, #tpu.memory_space<vmem>>, vector<8x32xf32>
    tpu.vector_store %arg10[%c0_25, %c0_26], %34 {strides = array<i32>} : memref<8x32xf32, #tpu.memory_space<vmem>>, vector<8x32xf32>,
    return
  }
  func.func @transform_0(%arg0: i32) -> (i32, i32) {
    %c0_i32 = arith.constant 0 : i32
    %c0_i32_0 = arith.constant 0 : i32
    return %arg0, %c0_i32 : i32, i32
  }
  func.func @transform_1(%arg0: i32) -> (i32, i32) {
    %c0_i32 = arith.constant 0 : i32
    %c0_i32_0 = arith.constant 0 : i32
    %c0_i32_1 = arith.constant 0 : i32
    return %c0_i32, %c0_i32_0 : i32, i32
  }
  func.func @transform_2(%arg0: i32) -> (i32, i32) {
    %c0_i32 = arith.constant 0 : i32
    %c0_i32_0 = arith.constant 0 : i32
    %c0_i32_1 = arith.constant 0 : i32
    return %c0_i32, %c0_i32_0 : i32, i32
  }
  func.func @transform_3(%arg0: i32) -> (i32, i32) {
    %c0_i32 = arith.constant 0 : i32
    %c0_i32_0 = arith.constant 0 : i32
    %c0_i32_1 = arith.constant 0 : i32
    return %c0_i32, %c0_i32_0 : i32, i32
  }
  func.func @transform_4(%arg0: i32) -> (i32, i32) {
    %c0_i32 = arith.constant 0 : i32
    %c0_i32_0 = arith.constant 0 : i32
    %c0_i32_1 = arith.constant 0 : i32
    return %c0_i32, %c0_i32_0 : i32, i32
  }
  func.func @transform_5(%arg0: i32) -> (i32, i32) {
    %c0_i32 = arith.constant 0 : i32
    %c0_i32_0 = arith.constant 0 : i32
    %c0_i32_1 = arith.constant 0 : i32
    return %c0_i32, %c0_i32_0 : i32, i32
  }
  func.func @transform_6(%arg0: i32) -> (i32, i32) {
    %c0_i32 = arith.constant 0 : i32
    %c0_i32_0 = arith.constant 0 : i32
    %c0_i32_1 = arith.constant 0 : i32
    return %c0_i32, %c0_i32_0 : i32, i32
  }
  func.func @transform_7(%arg0: i32) -> (i32, i32) {
    %c0_i32 = arith.constant 0 : i32
    %c0_i32_0 = arith.constant 0 : i32
    %c0_i32_1 = arith.constant 0 : i32
    return %c0_i32, %c0_i32_0 : i32, i32
  }
  func.func @transform_8(%arg0: i32) -> (i32, i32) {
    %c0_i32 = arith.constant 0 : i32
    %c0_i32_0 = arith.constant 0 : i32
    %c0_i32_1 = arith.constant 0 : i32
    return %c0_i32, %c0_i32_0 : i32, i32
  }
  func.func @transform_9(%arg0: i32) -> (i32, i32) {
    %c0_i32 = arith.constant 0 : i32
    %c0_i32_0 = arith.constant 0 : i32
    return %arg0, %c0_i32 : i32, i32
  }
}

</mosaic_0001>

<llo_original>
// kernel: tpu_custom_call.1
$region0: #{tpu_custom_call.1}
  #allocation0 [shape = 'u32[]', space=smem, size = 0x4, offset = 0x4, fixed_abs, tag = 'smem constant byte address 0x4 - core index']
  #allocation1 [shape = 'u32[144,128]{1,0:T(1,128)}', space=vmem, size = 0x12000, scoped, tag = 'internal scratch']
  #allocation2 [shape = 'f32[1,1]{1,0:T(1,128)S(1)}', space=vmem, size = 0x200, scoped, tag = 'scoped memory for tpu_custom_call.1']
  %s0 = inlined_call_operand.hbm [shape: f32[8,128], index: 0, kind: input, shape index: {}]
  %s1 = inlined_call_operand.vmem [shape: f32[128,128], index: 1, kind: input, shape index: {}]
  %s2 = inlined_call_operand.vmem [shape: f32[1,128], index: 2, kind: input, shape index: {}]
  %s3 = inlined_call_operand.vmem [shape: f32[128,128], index: 3, kind: input, shape index: {}]
  %s4 = inlined_call_operand.vmem [shape: f32[1,128], index: 4, kind: input, shape index: {}]
  %s5 = inlined_call_operand.vmem [shape: f32[128,4], index: 5, kind: input, shape index: {}]
  %s6 = inlined_call_operand.<no memory space> [shape: f32[1,1], index: 6, kind: input, shape index: {}]
  %s7 = inlined_call_operand.vmem [shape: f32[4,128], index: 7, kind: input, shape index: {}]
  %s8 = inlined_call_operand.vmem [shape: f32[128,32], index: 8, kind: input, shape index: {}]
  %s9 = inlined_call_operand.hbm [shape: f32[8,32], index: 9, kind: output, shape index: {}]
  %s10 = sld [smem:[#allocation0]]
  $region50: #{tpu_custom_call.1} parent=0
    _
  %s12 = ssub.s32 1, %s10
  %s13 = scalar_select 0, %s12, %s10
  %v14 = vstv %s6
  %15 = vst [vmem:[#allocation2] sm:$0x1] %v14
  $region1: #{tpu_custom_call.1} parent=0
    #allocation3 [shape = 'u8[4096]{0}', space=vmem, size = 0x1000, scoped, tag = 'input window, operand 0, single buffered']
    #allocation4 [shape = 's32[1]{0}', space=sflag, size = 0x4, scoped, tag = 'scoped memory for tpu_custom_call.1']
    #allocation5 [shape = 's32[1]{0}', space=sflag, size = 0x4, scoped, tag = 'scoped memory for tpu_custom_call.1']
    #allocation6 [shape = 'u8[4096]{0}', space=vmem, size = 0x1000, scoped, tag = 'output window, operand 0, single buffered']
    %16 = vsyncpa [#allocation4], 0
    %17 = vsyncpa [#allocation5], 0
    // Predicated region
    $region2: #{tpu_custom_call.1} parent=1 // pred_check
      _
    $region3: #{tpu_custom_call.1} parent=1 // pred_check_branch
      %19 = sbr.rel (0) target = $region5
    $region4: #{tpu_custom_call.1} parent=1 // pred_region
      %s21 = ssub.s32 128, 128
      %22 = vsyncadd [#allocation4], %s21
      %s24 = sshll.u32 [#allocation3], 4
      %s25 = int_to_ptr.vmem [resolvable:$true] %s24
      %27 = dma.hbm_to_vmem [thread:$0]  %s0, 128, %s25, [#allocation4]
    $region5: #{tpu_custom_call.1} parent=1 // pred_fallthru
      _
    // Predicated region
    $region6: #{tpu_custom_call.1} parent=1 // pred_check
      _
    $region7: #{tpu_custom_call.1} parent=1 // pred_check_branch
      %29 = sbr.rel (0) target = $region9
    $region8: #{tpu_custom_call.1} parent=1 // pred_region
      _
    $region9: #{tpu_custom_call.1} parent=1 // pred_fallthru
      _
    // Predicated region
    $region10: #{tpu_custom_call.1} parent=1 // pred_check
      _
    $region11: #{tpu_custom_call.1} parent=1 // pred_check_branch
      %31 = sbr.rel (0) target = $region13
    $region12: #{tpu_custom_call.1} parent=1 // pred_region
      _
    $region13: #{tpu_custom_call.1} parent=1 // pred_fallthru
      _
    // Predicated region
    $region14: #{tpu_custom_call.1} parent=1 // pred_check
      _
    $region15: #{tpu_custom_call.1} parent=1 // pred_check_branch
      %33 = sbr.rel (0) target = $region17
    $region16: #{tpu_custom_call.1} parent=1 // pred_region
      _
    $region17: #{tpu_custom_call.1} parent=1 // pred_fallthru
      _
    // Predicated region
    $region18: #{tpu_custom_call.1} parent=1 // pred_check
      _
    $region19: #{tpu_custom_call.1} parent=1 // pred_check_branch
      %35 = sbr.rel (0) target = $region21
    $region20: #{tpu_custom_call.1} parent=1 // pred_region
      _
    $region21: #{tpu_custom_call.1} parent=1 // pred_fallthru
      _
    // Predicated region
    $region22: #{tpu_custom_call.1} parent=1 // pred_check
      _
    $region23: #{tpu_custom_call.1} parent=1 // pred_check_branch
      %37 = sbr.rel (0) target = $region25
    $region24: #{tpu_custom_call.1} parent=1 // pred_region
      _
    $region25: #{tpu_custom_call.1} parent=1 // pred_fallthru
      _
    // Predicated region
    $region26: #{tpu_custom_call.1} parent=1 // pred_check
      _
    $region27: #{tpu_custom_call.1} parent=1 // pred_check_branch
      %39 = sbr.rel (0) target = $region29
    $region28: #{tpu_custom_call.1} parent=1 // pred_region
      _
    $region29: #{tpu_custom_call.1} parent=1 // pred_fallthru
      _
    // Predicated region
    $region30: #{tpu_custom_call.1} parent=1 // pred_check
      _
    $region31: #{tpu_custom_call.1} parent=1 // pred_check_branch
      %41 = sbr.rel (0) target = $region33
    $region32: #{tpu_custom_call.1} parent=1 // pred_region
      _
    $region33: #{tpu_custom_call.1} parent=1 // pred_fallthru
      _
    // Predicated region
    $region34: #{tpu_custom_call.1} parent=1 // pred_check
      _
    $region35: #{tpu_custom_call.1} parent=1 // pred_check_branch
      %43 = sbr.rel (0) target = $region37
    $region36: #{tpu_custom_call.1} parent=1 // pred_region
      _
    $region37: #{tpu_custom_call.1} parent=1 // pred_fallthru
      _
    // Predicated region
    $region38: #{tpu_custom_call.1} parent=1 // pred_check
      _
    $region39: #{tpu_custom_call.1} parent=1 // pred_check_branch
      %45 = sbr.rel (0) target = $region41
    $region40: #{tpu_custom_call.1} parent=1 // pred_region
      %46 = dma.done [#allocation4], 128
    $region41: #{tpu_custom_call.1} parent=1 // pred_fallthru
      _
    %v47 = vld [vmem:[#allocation3] sm:$0xff]
    %v48 = vld [vmem:[%s1] sm:$0xff]
    %v49 = vld [vmem:[%s1 + $0x8] sm:$0xff]
    %v50 = vld [vmem:[%s1 + $0x10] sm:$0xff]
    %v51 = vld [vmem:[%s1 + $0x18] sm:$0xff]
    %v52 = vld [vmem:[%s1 + $0x20] sm:$0xff]
    %v53 = vld [vmem:[%s1 + $0x28] sm:$0xff]
    %v54 = vld [vmem:[%s1 + $0x30] sm:$0xff]
    %v55 = vld [vmem:[%s1 + $0x38] sm:$0xff]
    %v56 = vld [vmem:[%s1 + $0x40] sm:$0xff]
    %v57 = vld [vmem:[%s1 + $0x48] sm:$0xff]
    %v58 = vld [vmem:[%s1 + $0x50] sm:$0xff]
    %v59 = vld [vmem:[%s1 + $0x58] sm:$0xff]
    %v60 = vld [vmem:[%s1 + $0x60] sm:$0xff]
    %v61 = vld [vmem:[%s1 + $0x68] sm:$0xff]
    %v62 = vld [vmem:[%s1 + $0x70] sm:$0xff]
    %v63 = vld [vmem:[%s1 + $0x78] sm:$0xff]
    %v64 = vld [vmem:[%s2] sm:$0x1]
    %v66 = vlaneseq
    %v67 = vshrl.u32 %v66, 7
    %v68 = vsub.s32 0, %v67
    %v69 = vrot.slane %v64, %v68
    %71 = vmatprep.subr.mxu0 0.0
    %72 = vmatpush1.msra.mxu0 %v48
    %73 = vmatprep.subr.mxu0 0.0
    %74 = vmatpush1.msra.mxu0 %v49
    %75 = vmatprep.subr.mxu0 0.0
    %76 = vmatpush1.msra.mxu0 %v50
    %77 = vmatprep.subr.mxu0 0.0
    %78 = vmatpush1.msra.mxu0 %v51
    %79 = vmatprep.subr.mxu0 0.0
    %80 = vmatpush1.msra.mxu0 %v52
    %81 = vmatprep.subr.mxu0 0.0
    %82 = vmatpush1.msra.mxu0 %v53
    %83 = vmatprep.subr.mxu0 0.0
    %84 = vmatpush1.msra.mxu0 %v54
    %85 = vmatprep.subr.mxu0 0.0
    %86 = vmatpush1.msra.mxu0 %v55
    %87 = vmatprep.subr.mxu0 0.0
    %88 = vmatpush1.msra.mxu0 %v56
    %89 = vmatprep.subr.mxu0 0.0
    %90 = vmatpush1.msra.mxu0 %v57
    %91 = vmatprep.subr.mxu0 0.0
    %92 = vmatpush1.msra.mxu0 %v58
    %93 = vmatprep.subr.mxu0 0.0
    %94 = vmatpush1.msra.mxu0 %v59
    %95 = vmatprep.subr.mxu0 0.0
    %96 = vmatpush1.msra.mxu0 %v60
    %97 = vmatprep.subr.mxu0 0.0
    %98 = vmatpush1.msra.mxu0 %v61
    %99 = vmatprep.subr.mxu0 0.0
    %100 = vmatpush1.msra.mxu0 %v62
    %101 = vmatprep.subr.mxu0 0.0
    %102 = vmatpush1.msra.mxu0 %v63
    %103 = vmatprep.subr.mxu0 0.0
    %104 = vmatpush1.msra.mxu0 0.0
    %105 = vmatprep.subr.mxu0 0.0
    %106 = vmatpush1.msra.mxu0 0.0
    %107 = vmatprep.subr.mxu0 0.0
    %108 = vmatpush1.msra.mxu0 0.0
    %109 = vmatprep.subr.mxu0 0.0
    %110 = vmatpush1.msra.mxu0 0.0
    %111 = vmatprep.subr.mxu0 0.0
    %112 = vmatpush1.msra.mxu0 0.0
    %113 = vmatprep.subr.mxu0 0.0
    %114 = vmatpush1.msra.mxu0 0.0
    %115 = vmatprep.subr.mxu0 0.0
    %116 = vmatpush1.msra.mxu0 0.0
    %117 = vmatprep.subr.mxu0 0.0
    %118 = vmatpush1.msra.mxu0 0.0
    %119 = vmatprep.subr.mxu0 0.0
    %120 = vmatpush1.msra.mxu0 0.0
    %121 = vmatprep.subr.mxu0 0.0
    %122 = vmatpush1.msra.mxu0 0.0
    %123 = vmatprep.subr.mxu0 0.0
    %124 = vmatpush1.msra.mxu0 0.0
    %125 = vmatprep.subr.mxu0 0.0
    %126 = vmatpush1.msra.mxu0 0.0
    %127 = vmatprep.subr.mxu0 0.0
    %128 = vmatpush1.msra.mxu0 0.0
    %129 = vmatprep.subr.mxu0 0.0
    %130 = vmatpush1.msra.mxu0 0.0
    %131 = vmatprep.subr.mxu0 0.0
    %132 = vmatpush1.msra.mxu0 0.0
    %133 = vmatprep.subr.mxu0 0.0
    %134 = vmatpush1.msra.mxu0 0.0
    %135 = vmatprep.mubr.f32.mxu0 0.0
    %136 = vmatmul.mubr.f32.gmra.mrb[0].mxu0 %v47
    %v137 = vpop.f32.mrb[0].mxu0
    %v138 = vadd.f32 %v69, %v137
    %v139 = vpop.f32.mrb[0].mxu0
    %140 = vdwg.mxu0
    %v141 = vmax.f32 %v138, 0.0
    %v142 = vld [vmem:[%s3] sm:$0xff]
    %v143 = vld [vmem:[%s3 + $0x8] sm:$0xff]
    %v144 = vld [vmem:[%s3 + $0x10] sm:$0xff]
    %v145 = vld [vmem:[%s3 + $0x18] sm:$0xff]
    %v146 = vld [vmem:[%s3 + $0x20] sm:$0xff]
    %v147 = vld [vmem:[%s3 + $0x28] sm:$0xff]
    %v148 = vld [vmem:[%s3 + $0x30] sm:$0xff]
    %v149 = vld [vmem:[%s3 + $0x38] sm:$0xff]
    %v150 = vld [vmem:[%s3 + $0x40] sm:$0xff]
    %v151 = vld [vmem:[%s3 + $0x48] sm:$0xff]
    %v152 = vld [vmem:[%s3 + $0x50] sm:$0xff]
    %v153 = vld [vmem:[%s3 + $0x58] sm:$0xff]
    %v154 = vld [vmem:[%s3 + $0x60] sm:$0xff]
    %v155 = vld [vmem:[%s3 + $0x68] sm:$0xff]
    %v156 = vld [vmem:[%s3 + $0x70] sm:$0xff]
    %v157 = vld [vmem:[%s3 + $0x78] sm:$0xff]
    %v158 = vld [vmem:[%s4] sm:$0x1]
    %v160 = vlaneseq
    %v161 = vshrl.u32 %v160, 7
    %v162 = vsub.s32 0, %v161
    %v163 = vrot.slane %v158, %v162
    %165 = vmatprep.subr.mxu0 0.0
    %166 = vmatpush1.msra.mxu0 %v142
    %167 = vmatprep.subr.mxu0 0.0
    %168 = vmatpush1.msra.mxu0 %v143
    %169 = vmatprep.subr.mxu0 0.0
    %170 = vmatpush1.msra.mxu0 %v144
    %171 = vmatprep.subr.mxu0 0.0
    %172 = vmatpush1.msra.mxu0 %v145
    %173 = vmatprep.subr.mxu0 0.0
    %174 = vmatpush1.msra.mxu0 %v146
    %175 = vmatprep.subr.mxu0 0.0
    %176 = vmatpush1.msra.mxu0 %v147
    %177 = vmatprep.subr.mxu0 0.0
    %178 = vmatpush1.msra.mxu0 %v148
    %179 = vmatprep.subr.mxu0 0.0
    %180 = vmatpush1.msra.mxu0 %v149
    %181 = vmatprep.subr.mxu0 0.0
    %182 = vmatpush1.msra.mxu0 %v150
    %183 = vmatprep.subr.mxu0 0.0
    %184 = vmatpush1.msra.mxu0 %v151
    %185 = vmatprep.subr.mxu0 0.0
    %186 = vmatpush1.msra.mxu0 %v152
    %187 = vmatprep.subr.mxu0 0.0
    %188 = vmatpush1.msra.mxu0 %v153
    %189 = vmatprep.subr.mxu0 0.0
    %190 = vmatpush1.msra.mxu0 %v154
    %191 = vmatprep.subr.mxu0 0.0
    %192 = vmatpush1.msra.mxu0 %v155
    %193 = vmatprep.subr.mxu0 0.0
    %194 = vmatpush1.msra.mxu0 %v156
    %195 = vmatprep.subr.mxu0 0.0
    %196 = vmatpush1.msra.mxu0 %v157
    %197 = vmatprep.subr.mxu0 0.0
    %198 = vmatpush1.msra.mxu0 0.0
    %199 = vmatprep.subr.mxu0 0.0
    %200 = vmatpush1.msra.mxu0 0.0
    %201 = vmatprep.subr.mxu0 0.0
    %202 = vmatpush1.msra.mxu0 0.0
    %203 = vmatprep.subr.mxu0 0.0
    %204 = vmatpush1.msra.mxu0 0.0
    %205 = vmatprep.subr.mxu0 0.0
    %206 = vmatpush1.msra.mxu0 0.0
    %207 = vmatprep.subr.mxu0 0.0
    %208 = vmatpush1.msra.mxu0 0.0
    %209 = vmatprep.subr.mxu0 0.0
    %210 = vmatpush1.msra.mxu0 0.0
    %211 = vmatprep.subr.mxu0 0.0
    %212 = vmatpush1.msra.mxu0 0.0
    %213 = vmatprep.subr.mxu0 0.0
    %214 = vmatpush1.msra.mxu0 0.0
    %215 = vmatprep.subr.mxu0 0.0
    %216 = vmatpush1.msra.mxu0 0.0
    %217 = vmatprep.subr.mxu0 0.0
    %218 = vmatpush1.msra.mxu0 0.0
    %219 = vmatprep.subr.mxu0 0.0
    %220 = vmatpush1.msra.mxu0 0.0
    %221 = vmatprep.subr.mxu0 0.0
    %222 = vmatpush1.msra.mxu0 0.0
    %223 = vmatprep.subr.mxu0 0.0
    %224 = vmatpush1.msra.mxu0 0.0
    %225 = vmatprep.subr.mxu0 0.0
    %226 = vmatpush1.msra.mxu0 0.0
    %227 = vmatprep.subr.mxu0 0.0
    %228 = vmatpush1.msra.mxu0 0.0
    %229 = vmatprep.mubr.f32.mxu0 0.0
    %230 = vmatmul.mubr.f32.gmra.mrb[0].mxu0 %v141
    %v231 = vpop.f32.mrb[0].mxu0
    %v232 = vadd.f32 %v163, %v231
    %v233 = vpop.f32.mrb[0].mxu0
    %234 = vdwg.mxu0
    %v235 = vmax.f32 %v232, 0.0
    %v236 = vld [vmem:[%s5] sm:$0xff]
    %v237 = vld [vmem:[%s5 + $0x8] sm:$0xff]
    %v238 = vld [vmem:[%s5 + $0x10] sm:$0xff]
    %v239 = vld [vmem:[%s5 + $0x18] sm:$0xff]
    %v240 = vld [vmem:[%s5 + $0x20] sm:$0xff]
    %v241 = vld [vmem:[%s5 + $0x28] sm:$0xff]
    %v242 = vld [vmem:[%s5 + $0x30] sm:$0xff]
    %v243 = vld [vmem:[%s5 + $0x38] sm:$0xff]
    %v244 = vld [vmem:[%s5 + $0x40] sm:$0xff]
    %v245 = vld [vmem:[%s5 + $0x48] sm:$0xff]
    %v246 = vld [vmem:[%s5 + $0x50] sm:$0xff]
    %v247 = vld [vmem:[%s5 + $0x58] sm:$0xff]
    %v248 = vld [vmem:[%s5 + $0x60] sm:$0xff]
    %v249 = vld [vmem:[%s5 + $0x68] sm:$0xff]
    %v250 = vld [vmem:[%s5 + $0x70] sm:$0xff]
    %v251 = vld [vmem:[%s5 + $0x78] sm:$0xff]
    %v252 = vld [vmem:[#allocation2] sm:$0x1]
    %v254 = vlaneseq
    %v255 = vshrl.u32 %v254, 7
    %v256 = vsub.s32 0, %v255
    %v257 = vrot.slane %v252, %v256
    %258 = vset.pattern.permute.xlu0 0
    %259 = vperm.xlu0 %258, %v257
    %v260 = vpop.permute.xlu0 %259
    %262 = vmatprep.subr.mxu0 0.0
    %263 = vmatpush1.msra.mxu0 %v236
    %264 = vmatprep.subr.mxu0 0.0
    %265 = vmatpush1.msra.mxu0 %v237
    %266 = vmatprep.subr.mxu0 0.0
    %267 = vmatpush1.msra.mxu0 %v238
    %268 = vmatprep.subr.mxu0 0.0
    %269 = vmatpush1.msra.mxu0 %v239
    %270 = vmatprep.subr.mxu0 0.0
    %271 = vmatpush1.msra.mxu0 %v240
    %272 = vmatprep.subr.mxu0 0.0
    %273 = vmatpush1.msra.mxu0 %v241
    %274 = vmatprep.subr.mxu0 0.0
    %275 = vmatpush1.msra.mxu0 %v242
    %276 = vmatprep.subr.mxu0 0.0
    %277 = vmatpush1.msra.mxu0 %v243
    %278 = vmatprep.subr.mxu0 0.0
    %279 = vmatpush1.msra.mxu0 %v244
    %280 = vmatprep.subr.mxu0 0.0
    %281 = vmatpush1.msra.mxu0 %v245
    %282 = vmatprep.subr.mxu0 0.0
    %283 = vmatpush1.msra.mxu0 %v246
    %284 = vmatprep.subr.mxu0 0.0
    %285 = vmatpush1.msra.mxu0 %v247
    %286 = vmatprep.subr.mxu0 0.0
    %287 = vmatpush1.msra.mxu0 %v248
    %288 = vmatprep.subr.mxu0 0.0
    %289 = vmatpush1.msra.mxu0 %v249
    %290 = vmatprep.subr.mxu0 0.0
    %291 = vmatpush1.msra.mxu0 %v250
    %292 = vmatprep.subr.mxu0 0.0
    %293 = vmatpush1.msra.mxu0 %v251
    %294 = vmatprep.subr.mxu0 0.0
    %295 = vmatpush1.msra.mxu0 0.0
    %296 = vmatprep.subr.mxu0 0.0
    %297 = vmatpush1.msra.mxu0 0.0
    %298 = vmatprep.subr.mxu0 0.0
    %299 = vmatpush1.msra.mxu0 0.0
    %300 = vmatprep.subr.mxu0 0.0
    %301 = vmatpush1.msra.mxu0 0.0
    %302 = vmatprep.subr.mxu0 0.0
    %303 = vmatpush1.msra.mxu0 0.0
    %304 = vmatprep.subr.mxu0 0.0
    %305 = vmatpush1.msra.mxu0 0.0
    %306 = vmatprep.subr.mxu0 0.0
    %307 = vmatpush1.msra.mxu0 0.0
    %308 = vmatprep.subr.mxu0 0.0
    %309 = vmatpush1.msra.mxu0 0.0
    %310 = vmatprep.subr.mxu0 0.0
    %311 = vmatpush1.msra.mxu0 0.0
    %312 = vmatprep.subr.mxu0 0.0
    %313 = vmatpush1.msra.mxu0 0.0
    %314 = vmatprep.subr.mxu0 0.0
    %315 = vmatpush1.msra.mxu0 0.0
    %316 = vmatprep.subr.mxu0 0.0
    %317 = vmatpush1.msra.mxu0 0.0
    %318 = vmatprep.subr.mxu0 0.0
    %319 = vmatpush1.msra.mxu0 0.0
    %320 = vmatprep.subr.mxu0 0.0
    %321 = vmatpush1.msra.mxu0 0.0
    %322 = vmatprep.subr.mxu0 0.0
    %323 = vmatpush1.msra.mxu0 0.0
    %324 = vmatprep.subr.mxu0 0.0
    %325 = vmatpush1.msra.mxu0 0.0
    %326 = vmatprep.mubr.f32.mxu0 0.0
    %327 = vmatmul.mubr.f32.gmra.mrb[0].mxu0 %v235
    %v328 = vpop.f32.mrb[0].mxu0
    %v329 = vadd.f32 %v260, %v328
    %v330 = vpop.f32.mrb[0].mxu0
    %331 = vdwg.mxu0
    %vm332 = vcmask 31744
    %v333 = vsel %vm332, %v329, -inf
    %334 = vmax.xlane.f32.xlu0 %v333
    %v335 = vpop.xlane.xlu0 %334
    %v336 = vsub.f32 %v329, %v335
    %v337 = vmul.f32 %v336, 1.442695
    %v338 = vpow.pop %v337
    %v339 = vsel %vm332, %v338, 0.0
    %340 = vadd.xlane.f32.xlu0 %v339
    %v341 = vpop.xlane.xlu0 %340
    %v342 = vrcp.pop %v341
    %v343 = vmul.f32 %v338, %v342
    %v344 = vld [vmem:[%s7] sm:$0xf]
    %v346 = vsel %vm332, %v343, 0
    %vm348 = vcmask 1043456
    %v350 = vsel %vm348, %v344, 0
    %352 = vmatprep.subr.mxu0 0.0
    %353 = vmatpush1.msra.mxu0 %v350
    %354 = vmatprep.subr.mxu0 0.0
    %355 = vmatpush1.msra.mxu0 0.0
    %356 = vmatprep.subr.mxu0 0.0
    %357 = vmatpush1.msra.mxu0 0.0
    %358 = vmatprep.subr.mxu0 0.0
    %359 = vmatpush1.msra.mxu0 0.0
    %360 = vmatprep.subr.mxu0 0.0
    %361 = vmatpush1.msra.mxu0 0.0
    %362 = vmatprep.subr.mxu0 0.0
    %363 = vmatpush1.msra.mxu0 0.0
    %364 = vmatprep.subr.mxu0 0.0
    %365 = vmatpush1.msra.mxu0 0.0
    %366 = vmatprep.subr.mxu0 0.0
    %367 = vmatpush1.msra.mxu0 0.0
    %368 = vmatprep.subr.mxu0 0.0
    %369 = vmatpush1.msra.mxu0 0.0
    %370 = vmatprep.subr.mxu0 0.0
    %371 = vmatpush1.msra.mxu0 0.0
    %372 = vmatprep.subr.mxu0 0.0
    %373 = vmatpush1.msra.mxu0 0.0
    %374 = vmatprep.subr.mxu0 0.0
    %375 = vmatpush1.msra.mxu0 0.0
    %376 = vmatprep.subr.mxu0 0.0
    %377 = vmatpush1.msra.mxu0 0.0
    %378 = vmatprep.subr.mxu0 0.0
    %379 = vmatpush1.msra.mxu0 0.0
    %380 = vmatprep.subr.mxu0 0.0
    %381 = vmatpush1.msra.mxu0 0.0
    %382 = vmatprep.subr.mxu0 0.0
    %383 = vmatpush1.msra.mxu0 0.0
    %384 = vmatprep.subr.mxu0 0.0
    %385 = vmatpush1.msra.mxu0 0.0
    %386 = vmatprep.subr.mxu0 0.0
    %387 = vmatpush1.msra.mxu0 0.0
    %388 = vmatprep.subr.mxu0 0.0
    %389 = vmatpush1.msra.mxu0 0.0
    %390 = vmatprep.subr.mxu0 0.0
    %391 = vmatpush1.msra.mxu0 0.0
    %392 = vmatprep.subr.mxu0 0.0
    %393 = vmatpush1.msra.mxu0 0.0
    %394 = vmatprep.subr.mxu0 0.0
    %395 = vmatpush1.msra.mxu0 0.0
    %396 = vmatprep.subr.mxu0 0.0
    %397 = vmatpush1.msra.mxu0 0.0
    %398 = vmatprep.subr.mxu0 0.0
    %399 = vmatpush1.msra.mxu0 0.0
    %400 = vmatprep.subr.mxu0 0.0
    %401 = vmatpush1.msra.mxu0 0.0
    %402 = vmatprep.subr.mxu0 0.0
    %403 = vmatpush1.msra.mxu0 0.0
    %404 = vmatprep.subr.mxu0 0.0
    %405 = vmatpush1.msra.mxu0 0.0
    %406 = vmatprep.subr.mxu0 0.0
    %407 = vmatpush1.msra.mxu0 0.0
    %408 = vmatprep.subr.mxu0 0.0
    %409 = vmatpush1.msra.mxu0 0.0
    %410 = vmatprep.subr.mxu0 0.0
    %411 = vmatpush1.msra.mxu0 0.0
    %412 = vmatprep.subr.mxu0 0.0
    %413 = vmatpush1.msra.mxu0 0.0
    %414 = vmatprep.subr.mxu0 0.0
    %415 = vmatpush1.msra.mxu0 0.0
    %416 = vmatprep.mubr.f32.mxu0 0.0
    %417 = vmatmul.mubr.f32.gmra.mrb[0].mxu0 %v346
    %v418 = vpop.f32.mrb[0].mxu0
    %v419 = vadd.f32 0.0, %v418
    %v420 = vpop.f32.mrb[0].mxu0
    %421 = vdwg.mxu0
    %v422 = vmul.f32 %v419, %v235
    %v423 = vld [vmem:[%s8] sm:$0xff]
    %v424 = vld [vmem:[%s8 + $0x8] sm:$0xff]
    %v425 = vld [vmem:[%s8 + $0x10] sm:$0xff]
    %v426 = vld [vmem:[%s8 + $0x18] sm:$0xff]
    %v427 = vld [vmem:[%s8 + $0x20] sm:$0xff]
    %v428 = vld [vmem:[%s8 + $0x28] sm:$0xff]
    %v429 = vld [vmem:[%s8 + $0x30] sm:$0xff]
    %v430 = vld [vmem:[%s8 + $0x38] sm:$0xff]
    %v431 = vld [vmem:[%s8 + $0x40] sm:$0xff]
    %v432 = vld [vmem:[%s8 + $0x48] sm:$0xff]
    %v433 = vld [vmem:[%s8 + $0x50] sm:$0xff]
    %v434 = vld [vmem:[%s8 + $0x58] sm:$0xff]
    %v435 = vld [vmem:[%s8 + $0x60] sm:$0xff]
    %v436 = vld [vmem:[%s8 + $0x68] sm:$0xff]
    %v437 = vld [vmem:[%s8 + $0x70] sm:$0xff]
    %v438 = vld [vmem:[%s8 + $0x78] sm:$0xff]
    %439 = vmatprep.subr.mxu0 0.0
    %440 = vmatpush1.msra.mxu0 %v423
    %441 = vmatprep.subr.mxu0 0.0
    %442 = vmatpush1.msra.mxu0 %v424
    %443 = vmatprep.subr.mxu0 0.0
    %444 = vmatpush1.msra.mxu0 %v425
    %445 = vmatprep.subr.mxu0 0.0
    %446 = vmatpush1.msra.mxu0 %v426
    %447 = vmatprep.subr.mxu0 0.0
    %448 = vmatpush1.msra.mxu0 %v427
    %449 = vmatprep.subr.mxu0 0.0
    %450 = vmatpush1.msra.mxu0 %v428
    %451 = vmatprep.subr.mxu0 0.0
    %452 = vmatpush1.msra.mxu0 %v429
    %453 = vmatprep.subr.mxu0 0.0
    %454 = vmatpush1.msra.mxu0 %v430
    %455 = vmatprep.subr.mxu0 0.0
    %456 = vmatpush1.msra.mxu0 %v431
    %457 = vmatprep.subr.mxu0 0.0
    %458 = vmatpush1.msra.mxu0 %v432
    %459 = vmatprep.subr.mxu0 0.0
    %460 = vmatpush1.msra.mxu0 %v433
    %461 = vmatprep.subr.mxu0 0.0
    %462 = vmatpush1.msra.mxu0 %v434
    %463 = vmatprep.subr.mxu0 0.0
    %464 = vmatpush1.msra.mxu0 %v435
    %465 = vmatprep.subr.mxu0 0.0
    %466 = vmatpush1.msra.mxu0 %v436
    %467 = vmatprep.subr.mxu0 0.0
    %468 = vmatpush1.msra.mxu0 %v437
    %469 = vmatprep.subr.mxu0 0.0
    %470 = vmatpush1.msra.mxu0 %v438
    %471 = vmatprep.subr.mxu0 0.0
    %472 = vmatpush1.msra.mxu0 0.0
    %473 = vmatprep.subr.mxu0 0.0
    %474 = vmatpush1.msra.mxu0 0.0
    %475 = vmatprep.subr.mxu0 0.0
    %476 = vmatpush1.msra.mxu0 0.0
    %477 = vmatprep.subr.mxu0 0.0
    %478 = vmatpush1.msra.mxu0 0.0
    %479 = vmatprep.subr.mxu0 0.0
    %480 = vmatpush1.msra.mxu0 0.0
    %481 = vmatprep.subr.mxu0 0.0
    %482 = vmatpush1.msra.mxu0 0.0
    %483 = vmatprep.subr.mxu0 0.0
    %484 = vmatpush1.msra.mxu0 0.0
    %485 = vmatprep.subr.mxu0 0.0
    %486 = vmatpush1.msra.mxu0 0.0
    %487 = vmatprep.subr.mxu0 0.0
    %488 = vmatpush1.msra.mxu0 0.0
    %489 = vmatprep.subr.mxu0 0.0
    %490 = vmatpush1.msra.mxu0 0.0
    %491 = vmatprep.subr.mxu0 0.0
    %492 = vmatpush1.msra.mxu0 0.0
    %493 = vmatprep.subr.mxu0 0.0
    %494 = vmatpush1.msra.mxu0 0.0
    %495 = vmatprep.subr.mxu0 0.0
    %496 = vmatpush1.msra.mxu0 0.0
    %497 = vmatprep.subr.mxu0 0.0
    %498 = vmatpush1.msra.mxu0 0.0
    %499 = vmatprep.subr.mxu0 0.0
    %500 = vmatpush1.msra.mxu0 0.0
    %501 = vmatprep.subr.mxu0 0.0
    %502 = vmatpush1.msra.mxu0 0.0
    %503 = vmatprep.mubr.f32.mxu0 0.0
    %504 = vmatmul.mubr.f32.gmra.mrb[0].mxu0 %v422
    %v505 = vpop.f32.mrb[0].mxu0
    %v506 = vadd.f32 0.0, %v505
    %v507 = vpop.f32.mrb[0].mxu0
    %508 = vdwg.mxu0
    %vm509 = vcmask 261120
    %510 = vst.msk [vmem:[#allocation6] sm:$0xff] %vm509, %v506
    // Predicated region
    $region42: #{tpu_custom_call.1} parent=1 // pred_check
      _
    $region43: #{tpu_custom_call.1} parent=1 // pred_check_branch
      %512 = sbr.rel (0) target = $region45
    $region44: #{tpu_custom_call.1} parent=1 // pred_region
      %s514 = ssub.s32 128, 128
      %515 = vsyncadd [#allocation5], %s514
      %s517 = sshll.u32 [#allocation6], 4
      %s518 = int_to_ptr.vmem [resolvable:$true] %s517
      %520 = dma.vmem_to_hbm [thread:$0]  %s518, 128, %s9, [#allocation5]
    $region45: #{tpu_custom_call.1} parent=1 // pred_fallthru
      _
    // Predicated region
    $region46: #{tpu_custom_call.1} parent=1 // pred_check
      _
    $region47: #{tpu_custom_call.1} parent=1 // pred_check_branch
      %522 = sbr.rel (0) target = $region49
    $region48: #{tpu_custom_call.1} parent=1 // pred_region
      %523 = dma.done [#allocation5], 128
    $region49: #{tpu_custom_call.1} parent=1 // pred_fallthru
      _
    %524 = vsyncpa [#allocation4], 1
    %525 = vsyncpa [#allocation5], 1

</llo_original>
